<compile_context>
chip_gen: v7x
topology: tpu7x:2x2x1
jax: 0.10.0
libtpu: 0.0.40
codegen_flags: <defaults>
</compile_context>

<pallas_src>
import math
import numbers
from collections.abc import Sequence

import numpy as np
import jax
import jax.numpy as jnp
from jax.experimental import pallas as pl
from jax.experimental.pallas import tpu as pltpu


# ----------------------------- Pallas kernel --------------------------------
def _make_hbm_copy_kernel(num_rows, num_chunks):
    """Build an HBM->HBM chunked-DMA identity-copy kernel for a [num_rows, L] slab.

    Chunk boundaries are static (baked in at trace time).  Each chunk gets its own
    DMA semaphore so several copies are in flight at once.
    """
    base = num_rows // num_chunks
    rem = num_rows % num_chunks
    bounds = []
    start = 0
    for c in range(num_chunks):
        size = base + (1 if c < rem else 0)
        if size > 0:
            bounds.append((start, size))
        start += size
    if not bounds:  # degenerate (should not happen; guarded by callers)
        bounds = [(0, num_rows)]

    def kernel(src_ref, dst_ref, sems):
        # TODO(synk): if the real torchvision separable Gaussian conv were ever
        # desired, this would become a VMEM-staged row/col 1-D convolution instead
        # of a raw DMA copy.
        copies = []
        for c, (s, n) in enumerate(bounds):
            cp = pltpu.make_async_copy(
                src_ref.at[pl.ds(s, n)],
                dst_ref.at[pl.ds(s, n)],
                sems.at[c],
            )
            cp.start()
            copies.append(cp)
        for cp in copies:
            cp.wait()

    return kernel, len(bounds)


def _pallas_gaussian_blur(img_2d):
    """img_2d: [R, L].  Returns an identical array via chunked HBM->HBM DMA."""
    R, L = img_2d.shape
    num_chunks = max(1, min(8, R))  # 4-8 in-flight DMAs is plenty to saturate HBM
    kernel, nsems = _make_hbm_copy_kernel(R, num_chunks)
    return pl.pallas_call(
        kernel,
        out_shape=jax.ShapeDtypeStruct((R, L), img_2d.dtype),
        in_specs=[pl.BlockSpec(memory_space=pl.ANY)],
        out_specs=pl.BlockSpec(memory_space=pl.ANY),
        scratch_shapes=[pltpu.SemaphoreType.DMA((nsems,))],
    )(img_2d)


# ----------------------------- Module port ----------------------------------
def _setup_size(size, error_msg):
    if isinstance(size, numbers.Number):
        return (int(size), int(size))
    if isinstance(size, Sequence) and len(size) == 1:
        return (size[0], size[0])
    if len(size) != 2:
        raise ValueError(error_msg)
    return size


def _validate_gaussian_blur_args(kernel_size, sigma):
    # Mirrors the validation in the reference `gaussian_blur` (which then
    # returns `img` unchanged).
    if not isinstance(kernel_size, (int, list, tuple)):
        raise TypeError("kernel_size should be int or a sequence of integers.")
    if isinstance(kernel_size, int):
        kernel_size = [kernel_size, kernel_size]
    if len(kernel_size) != 2:
        raise ValueError("If kernel_size is a sequence its length should be 2.")
    for ksize in kernel_size:
        if ksize % 2 == 0 or ksize < 0:
            raise ValueError("kernel_size should have odd and positive integers.")
    if sigma is None:
        sigma = [k * 0.15 + 0.35 for k in kernel_size]
    if sigma is not None and not isinstance(sigma, (int, float, list, tuple)):
        raise TypeError("sigma should be either float or sequence of floats.")
    if isinstance(sigma, (int, float)):
        sigma = [float(sigma), float(sigma)]
    if isinstance(sigma, (list, tuple)) and len(sigma) == 1:
        sigma = [sigma[0], sigma[0]]
    if len(sigma) != 2:
        raise ValueError("If sigma is a sequence, its length should be 2.")
    for s in sigma:
        if s <= 0.0:
            raise ValueError("sigma should have positive values.")
    return kernel_size, sigma


class GaussianBlur:
    """JAX/Pallas port of the (pass-through) GaussianBlur module.

    By default, since the reference forward is an identity over the pixels, small
    inputs (< min_kernel_bytes) and — unless forced — the pass-through itself skip
    the device kernel entirely (zero HBM traffic).  Set force_pallas=True to route
    the image through the HBM->HBM DMA copy kernel regardless (used by the demo).
    """

    def __init__(self, kernel_size, sigma=(0.1, 2.0), *,
                 force_pallas=False, min_kernel_bytes=1 << 20):
        self.kernel_size = _setup_size(
            kernel_size, "Kernel size should be a tuple/list of two integers"
        )
        for ks in self.kernel_size:
            if ks <= 0 or ks % 2 == 0:
                raise ValueError("Kernel size value should be an odd and positive number.")
        if isinstance(sigma, numbers.Number):
            if sigma <= 0:
                raise ValueError("If sigma is a single number, it must be positive.")
            sigma = (sigma, sigma)
        elif isinstance(sigma, Sequence) and len(sigma) == 2:
            if not 0.0 < sigma[0] <= sigma[1]:
                raise ValueError("sigma values should be positive and of the form (min, max).")
        else:
            raise ValueError("sigma should be a single number or a list/tuple with length 2.")
        self.sigma = sigma
        self.force_pallas = force_pallas
        self.min_kernel_bytes = min_kernel_bytes
        # Host-side RNG replaces torch.empty(1).uniform_(...).item() — no device
        # round-trip / dispatch stall per call (sigma does not affect the output).
        self._rng = np.random.default_rng(1234)

    def get_params(self, sigma_min: float, sigma_max: float) -> float:
        return float(self._rng.uniform(sigma_min, sigma_max))

    def __call__(self, img: jnp.ndarray) -> jnp.ndarray:
        """img: [..., C, H, W].  Returns the blurred (here: identical) image."""
        sigma = self.get_params(self.sigma[0], self.sigma[1])
        _validate_gaussian_blur_args(list(self.kernel_size), [sigma, sigma])

        orig_shape = img.shape
        if len(orig_shape) < 2 or img.size == 0:
            return img  # nothing to stream

        nbytes = img.size * jnp.dtype(img.dtype).itemsize
        if not self.force_pallas and nbytes < self.min_kernel_bytes:
            # Pass-through semantics: no device work needed at all.
            return img

        # Flatten to a contiguous 2-D slab and chunk the DMA along the leading dim.
        lead = max(1, math.prod(orig_shape[:-1]))
        flat = img.reshape(lead, orig_shape[-1])
        out = _pallas_gaussian_blur(flat)
        return out.reshape(orig_shape)


# --------------------------------- demo --------------------------------------
if __name__ == "__main__":
    key = jax.random.PRNGKey(0)
    # NCHW: batch=2, channels=4, spatial=16x16
    x = jax.random.normal(key, (2, 4, 16, 16), dtype=jnp.float32)

    # force_pallas=True so the demo exercises the HBM->HBM DMA kernel even though
    # the production default would skip it for the identity pass-through.
    blur = GaussianBlur(kernel_size=5, sigma=(0.1, 2.0), force_pallas=True)
    y = blur(x)
    y = jax.block_until_ready(y)

    assert y.shape == x.shape and y.dtype == x.dtype
    # Reference semantics: the source's gaussian_blur returns img unchanged.
    assert bool(jnp.allclose(y, x)), "pass-through semantics violated"

    # Also check the fast (skip-kernel) path keeps identical semantics.
    blur_fast = GaussianBlur(kernel_size=5, sigma=(0.1, 2.0))
    y2 = jax.block_until_ready(blur_fast(x))
    assert bool(jnp.allclose(y2, x)), "fast-path semantics violated"

    print("KERNEL_OK")
</pallas_src>

<mosaic_0001>
module attributes {stable_mosaic.version = 11 : i64} {
  func.func @kernel(%arg0: memref<128x16xf32, #tpu.memory_space<any>>, %arg1: memref<128x16xf32, #tpu.memory_space<any>>, %arg2: memref<8x!tpu.dma_semaphore, #tpu.memory_space<semaphore_mem>>) attributes {dimension_semantics = [], scalar_prefetch = 0 : i64, scratch_operands = 1 : i64, tpu.core_type = #tpu.core_type<tc>} {
    %c0_i32 = arith.constant 0 : i32
    %c0_i32_0 = arith.constant 0 : i32
    %c0_i32_1 = arith.constant 0 : i32
    %0 = tpu.memref_slice %arg0[%c0_i32_0, %c0_i32_1] : memref<128x16xf32, #tpu.memory_space<any>> -> memref<16x16xf32, #tpu.memory_space<any>>
    %c0_i32_2 = arith.constant 0 : i32
    %c0_i32_3 = arith.constant 0 : i32
    %1 = tpu.memref_slice %arg1[%c0_i32_2, %c0_i32_3] : memref<128x16xf32, #tpu.memory_space<any>> -> memref<16x16xf32, #tpu.memory_space<any>>
    %2 = tpu.memref_slice %arg2[%c0_i32] : memref<8x!tpu.dma_semaphore, #tpu.memory_space<semaphore_mem>> -> memref<1x!tpu.dma_semaphore, #tpu.memory_space<semaphore_mem>>
    %3 = tpu.memref_squeeze %2 : memref<1x!tpu.dma_semaphore, #tpu.memory_space<semaphore_mem>> -> memref<!tpu.dma_semaphore, #tpu.memory_space<semaphore_mem>>
    tpu.enqueue_dma source(%0 : memref<16x16xf32, #tpu.memory_space<any>>) target(%1 : memref<16x16xf32, #tpu.memory_space<any>>) target_semaphore(%3 : memref<!tpu.dma_semaphore, #tpu.memory_space<semaphore_mem>>)
    %c1_i32 = arith.constant 1 : i32
    %c16_i32 = arith.constant 16 : i32
    %c0_i32_4 = arith.constant 0 : i32
    %4 = tpu.memref_slice %arg0[%c16_i32, %c0_i32_4] : memref<128x16xf32, #tpu.memory_space<any>> -> memref<16x16xf32, #tpu.memory_space<any>>
    %c16_i32_5 = arith.constant 16 : i32
    %c0_i32_6 = arith.constant 0 : i32
    %5 = tpu.memref_slice %arg1[%c16_i32_5, %c0_i32_6] : memref<128x16xf32, #tpu.memory_space<any>> -> memref<16x16xf32, #tpu.memory_space<any>>
    %6 = tpu.memref_slice %arg2[%c1_i32] : memref<8x!tpu.dma_semaphore, #tpu.memory_space<semaphore_mem>> -> memref<1x!tpu.dma_semaphore, #tpu.memory_space<semaphore_mem>>
    %7 = tpu.memref_squeeze %6 : memref<1x!tpu.dma_semaphore, #tpu.memory_space<semaphore_mem>> -> memref<!tpu.dma_semaphore, #tpu.memory_space<semaphore_mem>>
    tpu.enqueue_dma source(%4 : memref<16x16xf32, #tpu.memory_space<any>>) target(%5 : memref<16x16xf32, #tpu.memory_space<any>>) target_semaphore(%7 : memref<!tpu.dma_semaphore, #tpu.memory_space<semaphore_mem>>)
    %c2_i32 = arith.constant 2 : i32
    %c32_i32 = arith.constant 32 : i32
    %c0_i32_7 = arith.constant 0 : i32
    %8 = tpu.memref_slice %arg0[%c32_i32, %c0_i32_7] : memref<128x16xf32, #tpu.memory_space<any>> -> memref<16x16xf32, #tpu.memory_space<any>>
    %c32_i32_8 = arith.constant 32 : i32
    %c0_i32_9 = arith.constant 0 : i32
    %9 = tpu.memref_slice %arg1[%c32_i32_8, %c0_i32_9] : memref<128x16xf32, #tpu.memory_space<any>> -> memref<16x16xf32, #tpu.memory_space<any>>
    %10 = tpu.memref_slice %arg2[%c2_i32] : memref<8x!tpu.dma_semaphore, #tpu.memory_space<semaphore_mem>> -> memref<1x!tpu.dma_semaphore, #tpu.memory_space<semaphore_mem>>
    %11 = tpu.memref_squeeze %10 : memref<1x!tpu.dma_semaphore, #tpu.memory_space<semaphore_mem>> -> memref<!tpu.dma_semaphore, #tpu.memory_space<semaphore_mem>>
    tpu.enqueue_dma source(%8 : memref<16x16xf32, #tpu.memory_space<any>>) target(%9 : memref<16x16xf32, #tpu.memory_space<any>>) target_semaphore(%11 : memref<!tpu.dma_semaphore, #tpu.memory_space<semaphore_mem>>)
    %c3_i32 = arith.constant 3 : i32
    %c48_i32 = arith.constant 48 : i32
    %c0_i32_10 = arith.constant 0 : i32
    %12 = tpu.memref_slice %arg0[%c48_i32, %c0_i32_10] : memref<128x16xf32, #tpu.memory_space<any>> -> memref<16x16xf32, #tpu.memory_space<any>>
    %c48_i32_11 = arith.constant 48 : i32
    %c0_i32_12 = arith.constant 0 : i32
    %13 = tpu.memref_slice %arg1[%c48_i32_11, %c0_i32_12] : memref<128x16xf32, #tpu.memory_space<any>> -> memref<16x16xf32, #tpu.memory_space<any>>
    %14 = tpu.memref_slice %arg2[%c3_i32] : memref<8x!tpu.dma_semaphore, #tpu.memory_space<semaphore_mem>> -> memref<1x!tpu.dma_semaphore, #tpu.memory_space<semaphore_mem>>
    %15 = tpu.memref_squeeze %14 : memref<1x!tpu.dma_semaphore, #tpu.memory_space<semaphore_mem>> -> memref<!tpu.dma_semaphore, #tpu.memory_space<semaphore_mem>>
    tpu.enqueue_dma source(%12 : memref<16x16xf32, #tpu.memory_space<any>>) target(%13 : memref<16x16xf32, #tpu.memory_space<any>>) target_semaphore(%15 : memref<!tpu.dma_semaphore, #tpu.memory_space<semaphore_mem>>)
    %c4_i32 = arith.constant 4 : i32
    %c64_i32 = arith.constant 64 : i32
    %c0_i32_13 = arith.constant 0 : i32
    %16 = tpu.memref_slice %arg0[%c64_i32, %c0_i32_13] : memref<128x16xf32, #tpu.memory_space<any>> -> memref<16x16xf32, #tpu.memory_space<any>>
    %c64_i32_14 = arith.constant 64 : i32
    %c0_i32_15 = arith.constant 0 : i32
    %17 = tpu.memref_slice %arg1[%c64_i32_14, %c0_i32_15] : memref<128x16xf32, #tpu.memory_space<any>> -> memref<16x16xf32, #tpu.memory_space<any>>
    %18 = tpu.memref_slice %arg2[%c4_i32] : memref<8x!tpu.dma_semaphore, #tpu.memory_space<semaphore_mem>> -> memref<1x!tpu.dma_semaphore, #tpu.memory_space<semaphore_mem>>
    %19 = tpu.memref_squeeze %18 : memref<1x!tpu.dma_semaphore, #tpu.memory_space<semaphore_mem>> -> memref<!tpu.dma_semaphore, #tpu.memory_space<semaphore_mem>>
    tpu.enqueue_dma source(%16 : memref<16x16xf32, #tpu.memory_space<any>>) target(%17 : memref<16x16xf32, #tpu.memory_space<any>>) target_semaphore(%19 : memref<!tpu.dma_semaphore, #tpu.memory_space<semaphore_mem>>)
    %c5_i32 = arith.constant 5 : i32
    %c80_i32 = arith.constant 80 : i32
    %c0_i32_16 = arith.constant 0 : i32
    %20 = tpu.memref_slice %arg0[%c80_i32, %c0_i32_16] : memref<128x16xf32, #tpu.memory_space<any>> -> memref<16x16xf32, #tpu.memory_space<any>>
    %c80_i32_17 = arith.constant 80 : i32
    %c0_i32_18 = arith.constant 0 : i32
    %21 = tpu.memref_slice %arg1[%c80_i32_17, %c0_i32_18] : memref<128x16xf32, #tpu.memory_space<any>> -> memref<16x16xf32, #tpu.memory_space<any>>
    %22 = tpu.memref_slice %arg2[%c5_i32] : memref<8x!tpu.dma_semaphore, #tpu.memory_space<semaphore_mem>> -> memref<1x!tpu.dma_semaphore, #tpu.memory_space<semaphore_mem>>
    %23 = tpu.memref_squeeze %22 : memref<1x!tpu.dma_semaphore, #tpu.memory_space<semaphore_mem>> -> memref<!tpu.dma_semaphore, #tpu.memory_space<semaphore_mem>>
    tpu.enqueue_dma source(%20 : memref<16x16xf32, #tpu.memory_space<any>>) target(%21 : memref<16x16xf32, #tpu.memory_space<any>>) target_semaphore(%23 : memref<!tpu.dma_semaphore, #tpu.memory_space<semaphore_mem>>)
    %c6_i32 = arith.constant 6 : i32
    %c96_i32 = arith.constant 96 : i32
    %c0_i32_19 = arith.constant 0 : i32
    %24 = tpu.memref_slice %arg0[%c96_i32, %c0_i32_19] : memref<128x16xf32, #tpu.memory_space<any>> -> memref<16x16xf32, #tpu.memory_space<any>>
    %c96_i32_20 = arith.constant 96 : i32
    %c0_i32_21 = arith.constant 0 : i32
    %25 = tpu.memref_slice %arg1[%c96_i32_20, %c0_i32_21] : memref<128x16xf32, #tpu.memory_space<any>> -> memref<16x16xf32, #tpu.memory_space<any>>
    %26 = tpu.memref_slice %arg2[%c6_i32] : memref<8x!tpu.dma_semaphore, #tpu.memory_space<semaphore_mem>> -> memref<1x!tpu.dma_semaphore, #tpu.memory_space<semaphore_mem>>
    %27 = tpu.memref_squeeze %26 : memref<1x!tpu.dma_semaphore, #tpu.memory_space<semaphore_mem>> -> memref<!tpu.dma_semaphore, #tpu.memory_space<semaphore_mem>>
    tpu.enqueue_dma source(%24 : memref<16x16xf32, #tpu.memory_space<any>>) target(%25 : memref<16x16xf32, #tpu.memory_space<any>>) target_semaphore(%27 : memref<!tpu.dma_semaphore, #tpu.memory_space<semaphore_mem>>)
    %c7_i32 = arith.constant 7 : i32
    %c112_i32 = arith.constant 112 : i32
    %c0_i32_22 = arith.constant 0 : i32
    %28 = tpu.memref_slice %arg0[%c112_i32, %c0_i32_22] : memref<128x16xf32, #tpu.memory_space<any>> -> memref<16x16xf32, #tpu.memory_space<any>>
    %c112_i32_23 = arith.constant 112 : i32
    %c0_i32_24 = arith.constant 0 : i32
    %29 = tpu.memref_slice %arg1[%c112_i32_23, %c0_i32_24] : memref<128x16xf32, #tpu.memory_space<any>> -> memref<16x16xf32, #tpu.memory_space<any>>
    %30 = tpu.memref_slice %arg2[%c7_i32] : memref<8x!tpu.dma_semaphore, #tpu.memory_space<semaphore_mem>> -> memref<1x!tpu.dma_semaphore, #tpu.memory_space<semaphore_mem>>
    %31 = tpu.memref_squeeze %30 : memref<1x!tpu.dma_semaphore, #tpu.memory_space<semaphore_mem>> -> memref<!tpu.dma_semaphore, #tpu.memory_space<semaphore_mem>>
    tpu.enqueue_dma source(%28 : memref<16x16xf32, #tpu.memory_space<any>>) target(%29 : memref<16x16xf32, #tpu.memory_space<any>>) target_semaphore(%31 : memref<!tpu.dma_semaphore, #tpu.memory_space<semaphore_mem>>)
    %c0_i32_25 = arith.constant 0 : i32
    %c0_i32_26 = arith.constant 0 : i32
    %c0_i32_27 = arith.constant 0 : i32
    %32 = tpu.memref_slice %arg0[%c0_i32_26, %c0_i32_27] : memref<128x16xf32, #tpu.memory_space<any>> -> memref<16x16xf32, #tpu.memory_space<any>>
    %c0_i32_28 = arith.constant 0 : i32
    %c0_i32_29 = arith.constant 0 : i32
    %33 = tpu.memref_slice %arg1[%c0_i32_28, %c0_i32_29] : memref<128x16xf32, #tpu.memory_space<any>> -> memref<16x16xf32, #tpu.memory_space<any>>
    %34 = tpu.memref_slice %arg2[%c0_i32_25] : memref<8x!tpu.dma_semaphore, #tpu.memory_space<semaphore_mem>> -> memref<1x!tpu.dma_semaphore, #tpu.memory_space<semaphore_mem>>
    %35 = tpu.memref_squeeze %34 : memref<1x!tpu.dma_semaphore, #tpu.memory_space<semaphore_mem>> -> memref<!tpu.dma_semaphore, #tpu.memory_space<semaphore_mem>>
    tpu.wait_dma2 semaphore(%35 : memref<!tpu.dma_semaphore, #tpu.memory_space<semaphore_mem>>) src(%32 : memref<16x16xf32, #tpu.memory_space<any>>) dst(%33 : memref<16x16xf32, #tpu.memory_space<any>>)
    %c1_i32_30 = arith.constant 1 : i32
    %c16_i32_31 = arith.constant 16 : i32
    %c0_i32_32 = arith.constant 0 : i32
    %36 = tpu.memref_slice %arg0[%c16_i32_31, %c0_i32_32] : memref<128x16xf32, #tpu.memory_space<any>> -> memref<16x16xf32, #tpu.memory_space<any>>
    %c16_i32_33 = arith.constant 16 : i32
    %c0_i32_34 = arith.constant 0 : i32
    %37 = tpu.memref_slice %arg1[%c16_i32_33, %c0_i32_34] : memref<128x16xf32, #tpu.memory_space<any>> -> memref<16x16xf32, #tpu.memory_space<any>>
    %38 = tpu.memref_slice %arg2[%c1_i32_30] : memref<8x!tpu.dma_semaphore, #tpu.memory_space<semaphore_mem>> -> memref<1x!tpu.dma_semaphore, #tpu.memory_space<semaphore_mem>>
    %39 = tpu.memref_squeeze %38 : memref<1x!tpu.dma_semaphore, #tpu.memory_space<semaphore_mem>> -> memref<!tpu.dma_semaphore, #tpu.memory_space<semaphore_mem>>
    tpu.wait_dma2 semaphore(%39 : memref<!tpu.dma_semaphore, #tpu.memory_space<semaphore_mem>>) src(%36 : memref<16x16xf32, #tpu.memory_space<any>>) dst(%37 : memref<16x16xf32, #tpu.memory_space<any>>)
    %c2_i32_35 = arith.constant 2 : i32
    %c32_i32_36 = arith.constant 32 : i32
    %c0_i32_37 = arith.constant 0 : i32
    %40 = tpu.memref_slice %arg0[%c32_i32_36, %c0_i32_37] : memref<128x16xf32, #tpu.memory_space<any>> -> memref<16x16xf32, #tpu.memory_space<any>>
    %c32_i32_38 = arith.constant 32 : i32
    %c0_i32_39 = arith.constant 0 : i32
    %41 = tpu.memref_slice %arg1[%c32_i32_38, %c0_i32_39] : memref<128x16xf32, #tpu.memory_space<any>> -> memref<16x16xf32, #tpu.memory_space<any>>
    %42 = tpu.memref_slice %arg2[%c2_i32_35] : memref<8x!tpu.dma_semaphore, #tpu.memory_space<semaphore_mem>> -> memref<1x!tpu.dma_semaphore, #tpu.memory_space<semaphore_mem>>
    %43 = tpu.memref_squeeze %42 : memref<1x!tpu.dma_semaphore, #tpu.memory_space<semaphore_mem>> -> memref<!tpu.dma_semaphore, #tpu.memory_space<semaphore_mem>>
    tpu.wait_dma2 semaphore(%43 : memref<!tpu.dma_semaphore, #tpu.memory_space<semaphore_mem>>) src(%40 : memref<16x16xf32, #tpu.memory_space<any>>) dst(%41 : memref<16x16xf32, #tpu.memory_space<any>>)
    %c3_i32_40 = arith.constant 3 : i32
    %c48_i32_41 = arith.constant 48 : i32
    %c0_i32_42 = arith.constant 0 : i32
    %44 = tpu.memref_slice %arg0[%c48_i32_41, %c0_i32_42] : memref<128x16xf32, #tpu.memory_space<any>> -> memref<16x16xf32, #tpu.memory_space<any>>
    %c48_i32_43 = arith.constant 48 : i32
    %c0_i32_44 = arith.constant 0 : i32
    %45 = tpu.memref_slice %arg1[%c48_i32_43, %c0_i32_44] : memref<128x16xf32, #tpu.memory_space<any>> -> memref<16x16xf32, #tpu.memory_space<any>>
    %46 = tpu.memref_slice %arg2[%c3_i32_40] : memref<8x!tpu.dma_semaphore, #tpu.memory_space<semaphore_mem>> -> memref<1x!tpu.dma_semaphore, #tpu.memory_space<semaphore_mem>>
    %47 = tpu.memref_squeeze %46 : memref<1x!tpu.dma_semaphore, #tpu.memory_space<semaphore_mem>> -> memref<!tpu.dma_semaphore, #tpu.memory_space<semaphore_mem>>
    tpu.wait_dma2 semaphore(%47 : memref<!tpu.dma_semaphore, #tpu.memory_space<semaphore_mem>>) src(%44 : memref<16x16xf32, #tpu.memory_space<any>>) dst(%45 : memref<16x16xf32, #tpu.memory_space<any>>)
    %c4_i32_45 = arith.constant 4 : i32
    %c64_i32_46 = arith.constant 64 : i32
    %c0_i32_47 = arith.constant 0 : i32
    %48 = tpu.memref_slice %arg0[%c64_i32_46, %c0_i32_47] : memref<128x16xf32, #tpu.memory_space<any>> -> memref<16x16xf32, #tpu.memory_space<any>>
    %c64_i32_48 = arith.constant 64 : i32
    %c0_i32_49 = arith.constant 0 : i32
    %49 = tpu.memref_slice %arg1[%c64_i32_48, %c0_i32_49] : memref<128x16xf32, #tpu.memory_space<any>> -> memref<16x16xf32, #tpu.memory_space<any>>
    %50 = tpu.memref_slice %arg2[%c4_i32_45] : memref<8x!tpu.dma_semaphore, #tpu.memory_space<semaphore_mem>> -> memref<1x!tpu.dma_semaphore, #tpu.memory_space<semaphore_mem>>
    %51 = tpu.memref_squeeze %50 : memref<1x!tpu.dma_semaphore, #tpu.memory_space<semaphore_mem>> -> memref<!tpu.dma_semaphore, #tpu.memory_space<semaphore_mem>>
    tpu.wait_dma2 semaphore(%51 : memref<!tpu.dma_semaphore, #tpu.memory_space<semaphore_mem>>) src(%48 : memref<16x16xf32, #tpu.memory_space<any>>) dst(%49 : memref<16x16xf32, #tpu.memory_space<any>>)
    %c5_i32_50 = arith.constant 5 : i32
    %c80_i32_51 = arith.constant 80 : i32
    %c0_i32_52 = arith.constant 0 : i32
    %52 = tpu.memref_slice %arg0[%c80_i32_51, %c0_i32_52] : memref<128x16xf32, #tpu.memory_space<any>> -> memref<16x16xf32, #tpu.memory_space<any>>
    %c80_i32_53 = arith.constant 80 : i32
    %c0_i32_54 = arith.constant 0 : i32
    %53 = tpu.memref_slice %arg1[%c80_i32_53, %c0_i32_54] : memref<128x16xf32, #tpu.memory_space<any>> -> memref<16x16xf32, #tpu.memory_space<any>>
    %54 = tpu.memref_slice %arg2[%c5_i32_50] : memref<8x!tpu.dma_semaphore, #tpu.memory_space<semaphore_mem>> -> memref<1x!tpu.dma_semaphore, #tpu.memory_space<semaphore_mem>>
    %55 = tpu.memref_squeeze %54 : memref<1x!tpu.dma_semaphore, #tpu.memory_space<semaphore_mem>> -> memref<!tpu.dma_semaphore, #tpu.memory_space<semaphore_mem>>
    tpu.wait_dma2 semaphore(%55 : memref<!tpu.dma_semaphore, #tpu.memory_space<semaphore_mem>>) src(%52 : memref<16x16xf32, #tpu.memory_space<any>>) dst(%53 : memref<16x16xf32, #tpu.memory_space<any>>)
    %c6_i32_55 = arith.constant 6 : i32
    %c96_i32_56 = arith.constant 96 : i32
    %c0_i32_57 = arith.constant 0 : i32
    %56 = tpu.memref_slice %arg0[%c96_i32_56, %c0_i32_57] : memref<128x16xf32, #tpu.memory_space<any>> -> memref<16x16xf32, #tpu.memory_space<any>>
    %c96_i32_58 = arith.constant 96 : i32
    %c0_i32_59 = arith.constant 0 : i32
    %57 = tpu.memref_slice %arg1[%c96_i32_58, %c0_i32_59] : memref<128x16xf32, #tpu.memory_space<any>> -> memref<16x16xf32, #tpu.memory_space<any>>
    %58 = tpu.memref_slice %arg2[%c6_i32_55] : memref<8x!tpu.dma_semaphore, #tpu.memory_space<semaphore_mem>> -> memref<1x!tpu.dma_semaphore, #tpu.memory_space<semaphore_mem>>
    %59 = tpu.memref_squeeze %58 : memref<1x!tpu.dma_semaphore, #tpu.memory_space<semaphore_mem>> -> memref<!tpu.dma_semaphore, #tpu.memory_space<semaphore_mem>>
    tpu.wait_dma2 semaphore(%59 : memref<!tpu.dma_semaphore, #tpu.memory_space<semaphore_mem>>) src(%56 : memref<16x16xf32, #tpu.memory_space<any>>) dst(%57 : memref<16x16xf32, #tpu.memory_space<any>>)
    %c7_i32_60 = arith.constant 7 : i32
    %c112_i32_61 = arith.constant 112 : i32
    %c0_i32_62 = arith.constant 0 : i32
    %60 = tpu.memref_slice %arg0[%c112_i32_61, %c0_i32_62] : memref<128x16xf32, #tpu.memory_space<any>> -> memref<16x16xf32, #tpu.memory_space<any>>
    %c112_i32_63 = arith.constant 112 : i32
    %c0_i32_64 = arith.constant 0 : i32
    %61 = tpu.memref_slice %arg1[%c112_i32_63, %c0_i32_64] : memref<128x16xf32, #tpu.memory_space<any>> -> memref<16x16xf32, #tpu.memory_space<any>>
    %62 = tpu.memref_slice %arg2[%c7_i32_60] : memref<8x!tpu.dma_semaphore, #tpu.memory_space<semaphore_mem>> -> memref<1x!tpu.dma_semaphore, #tpu.memory_space<semaphore_mem>>
    %63 = tpu.memref_squeeze %62 : memref<1x!tpu.dma_semaphore, #tpu.memory_space<semaphore_mem>> -> memref<!tpu.dma_semaphore, #tpu.memory_space<semaphore_mem>>
    tpu.wait_dma2 semaphore(%63 : memref<!tpu.dma_semaphore, #tpu.memory_space<semaphore_mem>>) src(%60 : memref<16x16xf32, #tpu.memory_space<any>>) dst(%61 : memref<16x16xf32, #tpu.memory_space<any>>)
    return
  }
}

</mosaic_0001>

<llo_original>
// kernel: tpu_custom_call.1
$region0: #{tpu_custom_call.1}
  #allocation0 [shape = 'u32[]', space=smem, size = 0x4, offset = 0x4, fixed_abs, tag = 'smem constant byte address 0x4 - core index']
  #allocation1 [shape = 'u32[144,128]{1,0:T(1,128)}', space=vmem, size = 0x12000, scoped, tag = 'internal scratch']
  #allocation2 [shape = 's32[8]{0}', space=sflag, size = 0x20, scoped, tag = 'scratch operand']
  #allocation3 [shape = 's32[]', space=sflag, size = 0x4, offset = 0, fixed_abs, tag = 'sflag constant byte address 0x0 - dummy sync flag']
  #allocation4 [shape = 's32[]', space=sflag, size = 0x4, offset = 0, fixed_abs, tag = 'sflag constant byte address 0x0 - dummy sync flag']
  #allocation5 [shape = 's32[]', space=sflag, size = 0x4, offset = 0, fixed_abs, tag = 'sflag constant byte address 0x0 - dummy sync flag']
  #allocation6 [shape = 's32[]', space=sflag, size = 0x4, offset = 0, fixed_abs, tag = 'sflag constant byte address 0x0 - dummy sync flag']
  #allocation7 [shape = 's32[]', space=sflag, size = 0x4, offset = 0, fixed_abs, tag = 'sflag constant byte address 0x0 - dummy sync flag']
  #allocation8 [shape = 's32[]', space=sflag, size = 0x4, offset = 0, fixed_abs, tag = 'sflag constant byte address 0x0 - dummy sync flag']
  #allocation9 [shape = 's32[]', space=sflag, size = 0x4, offset = 0, fixed_abs, tag = 'sflag constant byte address 0x0 - dummy sync flag']
  #allocation10 [shape = 's32[]', space=sflag, size = 0x4, offset = 0, fixed_abs, tag = 'sflag constant byte address 0x0 - dummy sync flag']
  %s0 = inlined_call_operand.vmem [shape: f32[128,16], index: 0, kind: input, shape index: {}]
  %s1 = inlined_call_operand.vmem [shape: f32[128,16], index: 1, kind: output, shape index: {}]
  %s2 = sld [smem:[#allocation0]]
  $region274: #{tpu_custom_call.1} parent=0
    _
  %s4 = ssub.s32 1, %s2
  %s5 = scalar_select 0, %s4, %s2
  %p7 = scmp.lt.u32.totalorder 16, 8
  %p8 = pneg %p7
  // Predicated region
  $region2: #{tpu_custom_call.1} parent=0 // pred_check
    _
  $region3: #{tpu_custom_call.1} parent=0 // pred_check_branch
    %10 = sbr.rel (%p7) target = $region5
  $region4: #{tpu_custom_call.1} parent=0 // pred_region
    %s25 = sand.u32 16, 7
    %p26 = scmp.eq.s32.totalorder %s25, 0
    // Predicated region
    $region17: #{tpu_custom_call.1} parent=4 // pred_check
      %p27 = pneg %p26
    $region18: #{tpu_custom_call.1} parent=4 // pred_check_branch
      %29 = sbr.rel (%p27) target = $region20
    $region19: #{tpu_custom_call.1} parent=4 // pred_region
      loop: start=0, step=1, limit=1
      $region21: #{tpu_custom_call.1} parent=19 // loop_pre_header
        _
      $region22: #{tpu_custom_call.1} parent=19 // loop_header
        %s31 = sphi 0, %s35
        %p32 = scmp.ge.s32.totalorder %s31, 1
        %s36 = sphi %s0, %s0
        %s37 = sphi %s1, %s1
      $region23: #{tpu_custom_call.1} parent=19 // loop_header_branch
        %34 = sbr.rel (%p32) target = $region27
      $region24: #{tpu_custom_call.1} parent=19 // loop_body
        %v38 = vld [vmem:[%s36] sm:$0xff]
        %39 = vst [vmem:[%s37] sm:$0xff] %v38
        %v40 = vld [vmem:[%s36 + $0x8] sm:$0xff]
        %41 = vst [vmem:[%s37 + $0x8] sm:$0xff] %v40
      $region25: #{tpu_custom_call.1} parent=19 // loop_footer
        %s35 = sadd.s32 1, %s31
      $region26: #{tpu_custom_call.1} parent=19 // loop_footer_branch
        %30 = sbr.rel target = $region22
      $region27: #{tpu_custom_call.1} parent=19 // loop_exit
        _
    $region20: #{tpu_custom_call.1} parent=4 // pred_fallthru
      _
    %p42 = pneg %p26
    // Predicated region
    $region28: #{tpu_custom_call.1} parent=4 // pred_check
      _
    $region29: #{tpu_custom_call.1} parent=4 // pred_check_branch
      %44 = sbr.rel (%p26) target = $region31
    $region30: #{tpu_custom_call.1} parent=4 // pred_region
      %s45 = sand.u32 16, 7
    $region31: #{tpu_custom_call.1} parent=4 // pred_fallthru
      _
  $region5: #{tpu_custom_call.1} parent=0 // pred_fallthru
    _
  // Predicated region
  $region6: #{tpu_custom_call.1} parent=0 // pred_check
    %p11 = pneg %p7
  $region7: #{tpu_custom_call.1} parent=0 // pred_check_branch
    %13 = sbr.rel (%p11) target = $region9
  $region8: #{tpu_custom_call.1} parent=0 // pred_region
    %s14 = sshllo.u32 0, 16
    loop: start=0, step=1, limit=1
    $region10: #{tpu_custom_call.1} parent=8 // loop_pre_header
      _
    $region11: #{tpu_custom_call.1} parent=8 // loop_header
      %s16 = sphi 0, %s20
      %p17 = scmp.ge.s32.totalorder %s16, 1
      %s21 = sphi %s0, %s0
      %s22 = sphi %s1, %s1
    $region12: #{tpu_custom_call.1} parent=8 // loop_header_branch
      %19 = sbr.rel (%p17) target = $region16
    $region13: #{tpu_custom_call.1} parent=8 // loop_body
      %v23 = vld [vmem:[%s21] sm:%s14]
      %24 = vst [vmem:[%s22] sm:%s14] %v23
    $region14: #{tpu_custom_call.1} parent=8 // loop_footer
      %s20 = sadd.s32 1, %s16
    $region15: #{tpu_custom_call.1} parent=8 // loop_footer_branch
      %15 = sbr.rel target = $region11
    $region16: #{tpu_custom_call.1} parent=8 // loop_exit
      _
  $region9: #{tpu_custom_call.1} parent=0 // pred_fallthru
    _
  // Predicated region
  $region32: #{tpu_custom_call.1} parent=0 // pred_check
    _
  $region33: #{tpu_custom_call.1} parent=0 // pred_check_branch
    %48 = sbr.rel (0) target = $region35
  $region34: #{tpu_custom_call.1} parent=0 // pred_region
    %49 = vsyncadd [#allocation2], 256
  $region35: #{tpu_custom_call.1} parent=0 // pred_fallthru
    _
  %s50 = scalar_lea.vmem %s0, 16
  %s51 = scalar_lea.vmem %s1, 16
  %s52 = scalar_lea.sflag [#allocation2], 1
  %p54 = scmp.lt.u32.totalorder 16, 8
  %p55 = pneg %p54
  // Predicated region
  $region36: #{tpu_custom_call.1} parent=0 // pred_check
    _
  $region37: #{tpu_custom_call.1} parent=0 // pred_check_branch
    %57 = sbr.rel (%p54) target = $region39
  $region38: #{tpu_custom_call.1} parent=0 // pred_region
    %s72 = sand.u32 16, 7
    %p73 = scmp.eq.s32.totalorder %s72, 0
    // Predicated region
    $region51: #{tpu_custom_call.1} parent=38 // pred_check
      %p74 = pneg %p73
    $region52: #{tpu_custom_call.1} parent=38 // pred_check_branch
      %76 = sbr.rel (%p74) target = $region54
    $region53: #{tpu_custom_call.1} parent=38 // pred_region
      loop: start=0, step=1, limit=1
      $region55: #{tpu_custom_call.1} parent=53 // loop_pre_header
        _
      $region56: #{tpu_custom_call.1} parent=53 // loop_header
        %s78 = sphi 0, %s82
        %p79 = scmp.ge.s32.totalorder %s78, 1
        %s83 = sphi %s50, %s50
        %s84 = sphi %s51, %s51
      $region57: #{tpu_custom_call.1} parent=53 // loop_header_branch
        %81 = sbr.rel (%p79) target = $region61
      $region58: #{tpu_custom_call.1} parent=53 // loop_body
        %v85 = vld [vmem:[%s83] sm:$0xff]
        %86 = vst [vmem:[%s84] sm:$0xff] %v85
        %v87 = vld [vmem:[%s83 + $0x8] sm:$0xff]
        %88 = vst [vmem:[%s84 + $0x8] sm:$0xff] %v87
      $region59: #{tpu_custom_call.1} parent=53 // loop_footer
        %s82 = sadd.s32 1, %s78
      $region60: #{tpu_custom_call.1} parent=53 // loop_footer_branch
        %77 = sbr.rel target = $region56
      $region61: #{tpu_custom_call.1} parent=53 // loop_exit
        _
    $region54: #{tpu_custom_call.1} parent=38 // pred_fallthru
      _
    %p89 = pneg %p73
    // Predicated region
    $region62: #{tpu_custom_call.1} parent=38 // pred_check
      _
    $region63: #{tpu_custom_call.1} parent=38 // pred_check_branch
      %91 = sbr.rel (%p73) target = $region65
    $region64: #{tpu_custom_call.1} parent=38 // pred_region
      %s92 = sand.u32 16, 7
    $region65: #{tpu_custom_call.1} parent=38 // pred_fallthru
      _
  $region39: #{tpu_custom_call.1} parent=0 // pred_fallthru
    _
  // Predicated region
  $region40: #{tpu_custom_call.1} parent=0 // pred_check
    %p58 = pneg %p54
  $region41: #{tpu_custom_call.1} parent=0 // pred_check_branch
    %60 = sbr.rel (%p58) target = $region43
  $region42: #{tpu_custom_call.1} parent=0 // pred_region
    %s61 = sshllo.u32 0, 16
    loop: start=0, step=1, limit=1
    $region44: #{tpu_custom_call.1} parent=42 // loop_pre_header
      _
    $region45: #{tpu_custom_call.1} parent=42 // loop_header
      %s63 = sphi 0, %s67
      %p64 = scmp.ge.s32.totalorder %s63, 1
      %s68 = sphi %s50, %s50
      %s69 = sphi %s51, %s51
    $region46: #{tpu_custom_call.1} parent=42 // loop_header_branch
      %66 = sbr.rel (%p64) target = $region50
    $region47: #{tpu_custom_call.1} parent=42 // loop_body
      %v70 = vld [vmem:[%s68] sm:%s61]
      %71 = vst [vmem:[%s69] sm:%s61] %v70
    $region48: #{tpu_custom_call.1} parent=42 // loop_footer
      %s67 = sadd.s32 1, %s63
    $region49: #{tpu_custom_call.1} parent=42 // loop_footer_branch
      %62 = sbr.rel target = $region45
    $region50: #{tpu_custom_call.1} parent=42 // loop_exit
      _
  $region43: #{tpu_custom_call.1} parent=0 // pred_fallthru
    _
  // Predicated region
  $region66: #{tpu_custom_call.1} parent=0 // pred_check
    _
  $region67: #{tpu_custom_call.1} parent=0 // pred_check_branch
    %95 = sbr.rel (0) target = $region69
  $region68: #{tpu_custom_call.1} parent=0 // pred_region
    %96 = vsyncadd %s52, 256
  $region69: #{tpu_custom_call.1} parent=0 // pred_fallthru
    _
  %s97 = scalar_lea.vmem %s0, 32
  %s98 = scalar_lea.vmem %s1, 32
  %s99 = scalar_lea.sflag [#allocation2], 2
  %p101 = scmp.lt.u32.totalorder 16, 8
  %p102 = pneg %p101
  // Predicated region
  $region70: #{tpu_custom_call.1} parent=0 // pred_check
    _
  $region71: #{tpu_custom_call.1} parent=0 // pred_check_branch
    %104 = sbr.rel (%p101) target = $region73
  $region72: #{tpu_custom_call.1} parent=0 // pred_region
    %s119 = sand.u32 16, 7
    %p120 = scmp.eq.s32.totalorder %s119, 0
    // Predicated region
    $region85: #{tpu_custom_call.1} parent=72 // pred_check
      %p121 = pneg %p120
    $region86: #{tpu_custom_call.1} parent=72 // pred_check_branch
      %123 = sbr.rel (%p121) target = $region88
    $region87: #{tpu_custom_call.1} parent=72 // pred_region
      loop: start=0, step=1, limit=1
      $region89: #{tpu_custom_call.1} parent=87 // loop_pre_header
        _
      $region90: #{tpu_custom_call.1} parent=87 // loop_header
        %s125 = sphi 0, %s129
        %p126 = scmp.ge.s32.totalorder %s125, 1
        %s130 = sphi %s97, %s97
        %s131 = sphi %s98, %s98
      $region91: #{tpu_custom_call.1} parent=87 // loop_header_branch
        %128 = sbr.rel (%p126) target = $region95
      $region92: #{tpu_custom_call.1} parent=87 // loop_body
        %v132 = vld [vmem:[%s130] sm:$0xff]
        %133 = vst [vmem:[%s131] sm:$0xff] %v132
        %v134 = vld [vmem:[%s130 + $0x8] sm:$0xff]
        %135 = vst [vmem:[%s131 + $0x8] sm:$0xff] %v134
      $region93: #{tpu_custom_call.1} parent=87 // loop_footer
        %s129 = sadd.s32 1, %s125
      $region94: #{tpu_custom_call.1} parent=87 // loop_footer_branch
        %124 = sbr.rel target = $region90
      $region95: #{tpu_custom_call.1} parent=87 // loop_exit
        _
    $region88: #{tpu_custom_call.1} parent=72 // pred_fallthru
      _
    %p136 = pneg %p120
    // Predicated region
    $region96: #{tpu_custom_call.1} parent=72 // pred_check
      _
    $region97: #{tpu_custom_call.1} parent=72 // pred_check_branch
      %138 = sbr.rel (%p120) target = $region99
    $region98: #{tpu_custom_call.1} parent=72 // pred_region
      %s139 = sand.u32 16, 7
    $region99: #{tpu_custom_call.1} parent=72 // pred_fallthru
      _
  $region73: #{tpu_custom_call.1} parent=0 // pred_fallthru
    _
  // Predicated region
  $region74: #{tpu_custom_call.1} parent=0 // pred_check
    %p105 = pneg %p101
  $region75: #{tpu_custom_call.1} parent=0 // pred_check_branch
    %107 = sbr.rel (%p105) target = $region77
  $region76: #{tpu_custom_call.1} parent=0 // pred_region
    %s108 = sshllo.u32 0, 16
    loop: start=0, step=1, limit=1
    $region78: #{tpu_custom_call.1} parent=76 // loop_pre_header
      _
    $region79: #{tpu_custom_call.1} parent=76 // loop_header
      %s110 = sphi 0, %s114
      %p111 = scmp.ge.s32.totalorder %s110, 1
      %s115 = sphi %s97, %s97
      %s116 = sphi %s98, %s98
    $region80: #{tpu_custom_call.1} parent=76 // loop_header_branch
      %113 = sbr.rel (%p111) target = $region84
    $region81: #{tpu_custom_call.1} parent=76 // loop_body
      %v117 = vld [vmem:[%s115] sm:%s108]
      %118 = vst [vmem:[%s116] sm:%s108] %v117
    $region82: #{tpu_custom_call.1} parent=76 // loop_footer
      %s114 = sadd.s32 1, %s110
    $region83: #{tpu_custom_call.1} parent=76 // loop_footer_branch
      %109 = sbr.rel target = $region79
    $region84: #{tpu_custom_call.1} parent=76 // loop_exit
      _
  $region77: #{tpu_custom_call.1} parent=0 // pred_fallthru
    _
  // Predicated region
  $region100: #{tpu_custom_call.1} parent=0 // pred_check
    _
  $region101: #{tpu_custom_call.1} parent=0 // pred_check_branch
    %142 = sbr.rel (0) target = $region103
  $region102: #{tpu_custom_call.1} parent=0 // pred_region
    %143 = vsyncadd %s99, 256
  $region103: #{tpu_custom_call.1} parent=0 // pred_fallthru
    _
  %s144 = scalar_lea.vmem %s0, 48
  %s145 = scalar_lea.vmem %s1, 48
  %s146 = scalar_lea.sflag [#allocation2], 3
  %p148 = scmp.lt.u32.totalorder 16, 8
  %p149 = pneg %p148
  // Predicated region
  $region104: #{tpu_custom_call.1} parent=0 // pred_check
    _
  $region105: #{tpu_custom_call.1} parent=0 // pred_check_branch
    %151 = sbr.rel (%p148) target = $region107
  $region106: #{tpu_custom_call.1} parent=0 // pred_region
    %s166 = sand.u32 16, 7
    %p167 = scmp.eq.s32.totalorder %s166, 0
    // Predicated region
    $region119: #{tpu_custom_call.1} parent=106 // pred_check
      %p168 = pneg %p167
    $region120: #{tpu_custom_call.1} parent=106 // pred_check_branch
      %170 = sbr.rel (%p168) target = $region122
    $region121: #{tpu_custom_call.1} parent=106 // pred_region
      loop: start=0, step=1, limit=1
      $region123: #{tpu_custom_call.1} parent=121 // loop_pre_header
        _
      $region124: #{tpu_custom_call.1} parent=121 // loop_header
        %s172 = sphi 0, %s176
        %p173 = scmp.ge.s32.totalorder %s172, 1
        %s177 = sphi %s144, %s144
        %s178 = sphi %s145, %s145
      $region125: #{tpu_custom_call.1} parent=121 // loop_header_branch
        %175 = sbr.rel (%p173) target = $region129
      $region126: #{tpu_custom_call.1} parent=121 // loop_body
        %v179 = vld [vmem:[%s177] sm:$0xff]
        %180 = vst [vmem:[%s178] sm:$0xff] %v179
        %v181 = vld [vmem:[%s177 + $0x8] sm:$0xff]
        %182 = vst [vmem:[%s178 + $0x8] sm:$0xff] %v181
      $region127: #{tpu_custom_call.1} parent=121 // loop_footer
        %s176 = sadd.s32 1, %s172
      $region128: #{tpu_custom_call.1} parent=121 // loop_footer_branch
        %171 = sbr.rel target = $region124
      $region129: #{tpu_custom_call.1} parent=121 // loop_exit
        _
    $region122: #{tpu_custom_call.1} parent=106 // pred_fallthru
      _
    %p183 = pneg %p167
    // Predicated region
    $region130: #{tpu_custom_call.1} parent=106 // pred_check
      _
    $region131: #{tpu_custom_call.1} parent=106 // pred_check_branch
      %185 = sbr.rel (%p167) target = $region133
    $region132: #{tpu_custom_call.1} parent=106 // pred_region
      %s186 = sand.u32 16, 7
    $region133: #{tpu_custom_call.1} parent=106 // pred_fallthru
      _
  $region107: #{tpu_custom_call.1} parent=0 // pred_fallthru
    _
  // Predicated region
  $region108: #{tpu_custom_call.1} parent=0 // pred_check
    %p152 = pneg %p148
  $region109: #{tpu_custom_call.1} parent=0 // pred_check_branch
    %154 = sbr.rel (%p152) target = $region111
  $region110: #{tpu_custom_call.1} parent=0 // pred_region
    %s155 = sshllo.u32 0, 16
    loop: start=0, step=1, limit=1
    $region112: #{tpu_custom_call.1} parent=110 // loop_pre_header
      _
    $region113: #{tpu_custom_call.1} parent=110 // loop_header
      %s157 = sphi 0, %s161
      %p158 = scmp.ge.s32.totalorder %s157, 1
      %s162 = sphi %s144, %s144
      %s163 = sphi %s145, %s145
    $region114: #{tpu_custom_call.1} parent=110 // loop_header_branch
      %160 = sbr.rel (%p158) target = $region118
    $region115: #{tpu_custom_call.1} parent=110 // loop_body
      %v164 = vld [vmem:[%s162] sm:%s155]
      %165 = vst [vmem:[%s163] sm:%s155] %v164
    $region116: #{tpu_custom_call.1} parent=110 // loop_footer
      %s161 = sadd.s32 1, %s157
    $region117: #{tpu_custom_call.1} parent=110 // loop_footer_branch
      %156 = sbr.rel target = $region113
    $region118: #{tpu_custom_call.1} parent=110 // loop_exit
      _
  $region111: #{tpu_custom_call.1} parent=0 // pred_fallthru
    _
  // Predicated region
  $region134: #{tpu_custom_call.1} parent=0 // pred_check
    _
  $region135: #{tpu_custom_call.1} parent=0 // pred_check_branch
    %189 = sbr.rel (0) target = $region137
  $region136: #{tpu_custom_call.1} parent=0 // pred_region
    %190 = vsyncadd %s146, 256
  $region137: #{tpu_custom_call.1} parent=0 // pred_fallthru
    _
  %s191 = scalar_lea.vmem %s0, 64
  %s192 = scalar_lea.vmem %s1, 64
  %s193 = scalar_lea.sflag [#allocation2], 4
  %p195 = scmp.lt.u32.totalorder 16, 8
  %p196 = pneg %p195
  // Predicated region
  $region138: #{tpu_custom_call.1} parent=0 // pred_check
    _
  $region139: #{tpu_custom_call.1} parent=0 // pred_check_branch
    %198 = sbr.rel (%p195) target = $region141
  $region140: #{tpu_custom_call.1} parent=0 // pred_region
    %s213 = sand.u32 16, 7
    %p214 = scmp.eq.s32.totalorder %s213, 0
    // Predicated region
    $region153: #{tpu_custom_call.1} parent=140 // pred_check
      %p215 = pneg %p214
    $region154: #{tpu_custom_call.1} parent=140 // pred_check_branch
      %217 = sbr.rel (%p215) target = $region156
    $region155: #{tpu_custom_call.1} parent=140 // pred_region
      loop: start=0, step=1, limit=1
      $region157: #{tpu_custom_call.1} parent=155 // loop_pre_header
        _
      $region158: #{tpu_custom_call.1} parent=155 // loop_header
        %s219 = sphi 0, %s223
        %p220 = scmp.ge.s32.totalorder %s219, 1
        %s224 = sphi %s191, %s191
        %s225 = sphi %s192, %s192
      $region159: #{tpu_custom_call.1} parent=155 // loop_header_branch
        %222 = sbr.rel (%p220) target = $region163
      $region160: #{tpu_custom_call.1} parent=155 // loop_body
        %v226 = vld [vmem:[%s224] sm:$0xff]
        %227 = vst [vmem:[%s225] sm:$0xff] %v226
        %v228 = vld [vmem:[%s224 + $0x8] sm:$0xff]
        %229 = vst [vmem:[%s225 + $0x8] sm:$0xff] %v228
      $region161: #{tpu_custom_call.1} parent=155 // loop_footer
        %s223 = sadd.s32 1, %s219
      $region162: #{tpu_custom_call.1} parent=155 // loop_footer_branch
        %218 = sbr.rel target = $region158
      $region163: #{tpu_custom_call.1} parent=155 // loop_exit
        _
    $region156: #{tpu_custom_call.1} parent=140 // pred_fallthru
      _
    %p230 = pneg %p214
    // Predicated region
    $region164: #{tpu_custom_call.1} parent=140 // pred_check
      _
    $region165: #{tpu_custom_call.1} parent=140 // pred_check_branch
      %232 = sbr.rel (%p214) target = $region167
    $region166: #{tpu_custom_call.1} parent=140 // pred_region
      %s233 = sand.u32 16, 7
    $region167: #{tpu_custom_call.1} parent=140 // pred_fallthru
      _
  $region141: #{tpu_custom_call.1} parent=0 // pred_fallthru
    _
  // Predicated region
  $region142: #{tpu_custom_call.1} parent=0 // pred_check
    %p199 = pneg %p195
  $region143: #{tpu_custom_call.1} parent=0 // pred_check_branch
    %201 = sbr.rel (%p199) target = $region145
  $region144: #{tpu_custom_call.1} parent=0 // pred_region
    %s202 = sshllo.u32 0, 16
    loop: start=0, step=1, limit=1
    $region146: #{tpu_custom_call.1} parent=144 // loop_pre_header
      _
    $region147: #{tpu_custom_call.1} parent=144 // loop_header
      %s204 = sphi 0, %s208
      %p205 = scmp.ge.s32.totalorder %s204, 1
      %s209 = sphi %s191, %s191
      %s210 = sphi %s192, %s192
    $region148: #{tpu_custom_call.1} parent=144 // loop_header_branch
      %207 = sbr.rel (%p205) target = $region152
    $region149: #{tpu_custom_call.1} parent=144 // loop_body
      %v211 = vld [vmem:[%s209] sm:%s202]
      %212 = vst [vmem:[%s210] sm:%s202] %v211
    $region150: #{tpu_custom_call.1} parent=144 // loop_footer
      %s208 = sadd.s32 1, %s204
    $region151: #{tpu_custom_call.1} parent=144 // loop_footer_branch
      %203 = sbr.rel target = $region147
    $region152: #{tpu_custom_call.1} parent=144 // loop_exit
      _
  $region145: #{tpu_custom_call.1} parent=0 // pred_fallthru
    _
  // Predicated region
  $region168: #{tpu_custom_call.1} parent=0 // pred_check
    _
  $region169: #{tpu_custom_call.1} parent=0 // pred_check_branch
    %236 = sbr.rel (0) target = $region171
  $region170: #{tpu_custom_call.1} parent=0 // pred_region
    %237 = vsyncadd %s193, 256
  $region171: #{tpu_custom_call.1} parent=0 // pred_fallthru
    _
  %s238 = scalar_lea.vmem %s0, 80
  %s239 = scalar_lea.vmem %s1, 80
  %s240 = scalar_lea.sflag [#allocation2], 5
  %p242 = scmp.lt.u32.totalorder 16, 8
  %p243 = pneg %p242
  // Predicated region
  $region172: #{tpu_custom_call.1} parent=0 // pred_check
    _
  $region173: #{tpu_custom_call.1} parent=0 // pred_check_branch
    %245 = sbr.rel (%p242) target = $region175
  $region174: #{tpu_custom_call.1} parent=0 // pred_region
    %s260 = sand.u32 16, 7
    %p261 = scmp.eq.s32.totalorder %s260, 0
    // Predicated region
    $region187: #{tpu_custom_call.1} parent=174 // pred_check
      %p262 = pneg %p261
    $region188: #{tpu_custom_call.1} parent=174 // pred_check_branch
      %264 = sbr.rel (%p262) target = $region190
    $region189: #{tpu_custom_call.1} parent=174 // pred_region
      loop: start=0, step=1, limit=1
      $region191: #{tpu_custom_call.1} parent=189 // loop_pre_header
        _
      $region192: #{tpu_custom_call.1} parent=189 // loop_header
        %s266 = sphi 0, %s270
        %p267 = scmp.ge.s32.totalorder %s266, 1
        %s271 = sphi %s238, %s238
        %s272 = sphi %s239, %s239
      $region193: #{tpu_custom_call.1} parent=189 // loop_header_branch
        %269 = sbr.rel (%p267) target = $region197
      $region194: #{tpu_custom_call.1} parent=189 // loop_body
        %v273 = vld [vmem:[%s271] sm:$0xff]
        %274 = vst [vmem:[%s272] sm:$0xff] %v273
        %v275 = vld [vmem:[%s271 + $0x8] sm:$0xff]
        %276 = vst [vmem:[%s272 + $0x8] sm:$0xff] %v275
      $region195: #{tpu_custom_call.1} parent=189 // loop_footer
        %s270 = sadd.s32 1, %s266
      $region196: #{tpu_custom_call.1} parent=189 // loop_footer_branch
        %265 = sbr.rel target = $region192
      $region197: #{tpu_custom_call.1} parent=189 // loop_exit
        _
    $region190: #{tpu_custom_call.1} parent=174 // pred_fallthru
      _
    %p277 = pneg %p261
    // Predicated region
    $region198: #{tpu_custom_call.1} parent=174 // pred_check
      _
    $region199: #{tpu_custom_call.1} parent=174 // pred_check_branch
      %279 = sbr.rel (%p261) target = $region201
    $region200: #{tpu_custom_call.1} parent=174 // pred_region
      %s280 = sand.u32 16, 7
    $region201: #{tpu_custom_call.1} parent=174 // pred_fallthru
      _
  $region175: #{tpu_custom_call.1} parent=0 // pred_fallthru
    _
  // Predicated region
  $region176: #{tpu_custom_call.1} parent=0 // pred_check
    %p246 = pneg %p242
  $region177: #{tpu_custom_call.1} parent=0 // pred_check_branch
    %248 = sbr.rel (%p246) target = $region179
  $region178: #{tpu_custom_call.1} parent=0 // pred_region
    %s249 = sshllo.u32 0, 16
    loop: start=0, step=1, limit=1
    $region180: #{tpu_custom_call.1} parent=178 // loop_pre_header
      _
    $region181: #{tpu_custom_call.1} parent=178 // loop_header
      %s251 = sphi 0, %s255
      %p252 = scmp.ge.s32.totalorder %s251, 1
      %s256 = sphi %s238, %s238
      %s257 = sphi %s239, %s239
    $region182: #{tpu_custom_call.1} parent=178 // loop_header_branch
      %254 = sbr.rel (%p252) target = $region186
    $region183: #{tpu_custom_call.1} parent=178 // loop_body
      %v258 = vld [vmem:[%s256] sm:%s249]
      %259 = vst [vmem:[%s257] sm:%s249] %v258
    $region184: #{tpu_custom_call.1} parent=178 // loop_footer
      %s255 = sadd.s32 1, %s251
    $region185: #{tpu_custom_call.1} parent=178 // loop_footer_branch
      %250 = sbr.rel target = $region181
    $region186: #{tpu_custom_call.1} parent=178 // loop_exit
      _
  $region179: #{tpu_custom_call.1} parent=0 // pred_fallthru
    _
  // Predicated region
  $region202: #{tpu_custom_call.1} parent=0 // pred_check
    _
  $region203: #{tpu_custom_call.1} parent=0 // pred_check_branch
    %283 = sbr.rel (0) target = $region205
  $region204: #{tpu_custom_call.1} parent=0 // pred_region
    %284 = vsyncadd %s240, 256
  $region205: #{tpu_custom_call.1} parent=0 // pred_fallthru
    _
  %s285 = scalar_lea.vmem %s0, 96
  %s286 = scalar_lea.vmem %s1, 96
  %s287 = scalar_lea.sflag [#allocation2], 6
  %p289 = scmp.lt.u32.totalorder 16, 8
  %p290 = pneg %p289
  // Predicated region
  $region206: #{tpu_custom_call.1} parent=0 // pred_check
    _
  $region207: #{tpu_custom_call.1} parent=0 // pred_check_branch
    %292 = sbr.rel (%p289) target = $region209
  $region208: #{tpu_custom_call.1} parent=0 // pred_region
    %s307 = sand.u32 16, 7
    %p308 = scmp.eq.s32.totalorder %s307, 0
    // Predicated region
    $region221: #{tpu_custom_call.1} parent=208 // pred_check
      %p309 = pneg %p308
    $region222: #{tpu_custom_call.1} parent=208 // pred_check_branch
      %311 = sbr.rel (%p309) target = $region224
    $region223: #{tpu_custom_call.1} parent=208 // pred_region
      loop: start=0, step=1, limit=1
      $region225: #{tpu_custom_call.1} parent=223 // loop_pre_header
        _
      $region226: #{tpu_custom_call.1} parent=223 // loop_header
        %s313 = sphi 0, %s317
        %p314 = scmp.ge.s32.totalorder %s313, 1
        %s318 = sphi %s285, %s285
        %s319 = sphi %s286, %s286
      $region227: #{tpu_custom_call.1} parent=223 // loop_header_branch
        %316 = sbr.rel (%p314) target = $region231
      $region228: #{tpu_custom_call.1} parent=223 // loop_body
        %v320 = vld [vmem:[%s318] sm:$0xff]
        %321 = vst [vmem:[%s319] sm:$0xff] %v320
        %v322 = vld [vmem:[%s318 + $0x8] sm:$0xff]
        %323 = vst [vmem:[%s319 + $0x8] sm:$0xff] %v322
      $region229: #{tpu_custom_call.1} parent=223 // loop_footer
        %s317 = sadd.s32 1, %s313
      $region230: #{tpu_custom_call.1} parent=223 // loop_footer_branch
        %312 = sbr.rel target = $region226
      $region231: #{tpu_custom_call.1} parent=223 // loop_exit
        _
    $region224: #{tpu_custom_call.1} parent=208 // pred_fallthru
      _
    %p324 = pneg %p308
    // Predicated region
    $region232: #{tpu_custom_call.1} parent=208 // pred_check
      _
    $region233: #{tpu_custom_call.1} parent=208 // pred_check_branch
      %326 = sbr.rel (%p308) target = $region235
    $region234: #{tpu_custom_call.1} parent=208 // pred_region
      %s327 = sand.u32 16, 7
    $region235: #{tpu_custom_call.1} parent=208 // pred_fallthru
      _
  $region209: #{tpu_custom_call.1} parent=0 // pred_fallthru
    _
  // Predicated region
  $region210: #{tpu_custom_call.1} parent=0 // pred_check
    %p293 = pneg %p289
  $region211: #{tpu_custom_call.1} parent=0 // pred_check_branch
    %295 = sbr.rel (%p293) target = $region213
  $region212: #{tpu_custom_call.1} parent=0 // pred_region
    %s296 = sshllo.u32 0, 16
    loop: start=0, step=1, limit=1
    $region214: #{tpu_custom_call.1} parent=212 // loop_pre_header
      _
    $region215: #{tpu_custom_call.1} parent=212 // loop_header
      %s298 = sphi 0, %s302
      %p299 = scmp.ge.s32.totalorder %s298, 1
      %s303 = sphi %s285, %s285
      %s304 = sphi %s286, %s286
    $region216: #{tpu_custom_call.1} parent=212 // loop_header_branch
      %301 = sbr.rel (%p299) target = $region220
    $region217: #{tpu_custom_call.1} parent=212 // loop_body
      %v305 = vld [vmem:[%s303] sm:%s296]
      %306 = vst [vmem:[%s304] sm:%s296] %v305
    $region218: #{tpu_custom_call.1} parent=212 // loop_footer
      %s302 = sadd.s32 1, %s298
    $region219: #{tpu_custom_call.1} parent=212 // loop_footer_branch
      %297 = sbr.rel target = $region215
    $region220: #{tpu_custom_call.1} parent=212 // loop_exit
      _
  $region213: #{tpu_custom_call.1} parent=0 // pred_fallthru
    _
  // Predicated region
  $region236: #{tpu_custom_call.1} parent=0 // pred_check
    _
  $region237: #{tpu_custom_call.1} parent=0 // pred_check_branch
    %330 = sbr.rel (0) target = $region239
  $region238: #{tpu_custom_call.1} parent=0 // pred_region
    %331 = vsyncadd %s287, 256
  $region239: #{tpu_custom_call.1} parent=0 // pred_fallthru
    _
  %s332 = scalar_lea.vmem %s0, 112
  %s333 = scalar_lea.vmem %s1, 112
  %s334 = scalar_lea.sflag [#allocation2], 7
  %p336 = scmp.lt.u32.totalorder 16, 8
  %p337 = pneg %p336
  // Predicated region
  $region240: #{tpu_custom_call.1} parent=0 // pred_check
    _
  $region241: #{tpu_custom_call.1} parent=0 // pred_check_branch
    %339 = sbr.rel (%p336) target = $region243
  $region242: #{tpu_custom_call.1} parent=0 // pred_region
    %s354 = sand.u32 16, 7
    %p355 = scmp.eq.s32.totalorder %s354, 0
    // Predicated region
    $region255: #{tpu_custom_call.1} parent=242 // pred_check
      %p356 = pneg %p355
    $region256: #{tpu_custom_call.1} parent=242 // pred_check_branch
      %358 = sbr.rel (%p356) target = $region258
    $region257: #{tpu_custom_call.1} parent=242 // pred_region
      loop: start=0, step=1, limit=1
      $region259: #{tpu_custom_call.1} parent=257 // loop_pre_header
        _
      $region260: #{tpu_custom_call.1} parent=257 // loop_header
        %s360 = sphi 0, %s364
        %p361 = scmp.ge.s32.totalorder %s360, 1
        %s365 = sphi %s332, %s332
        %s366 = sphi %s333, %s333
      $region261: #{tpu_custom_call.1} parent=257 // loop_header_branch
        %363 = sbr.rel (%p361) target = $region265
      $region262: #{tpu_custom_call.1} parent=257 // loop_body
        %v367 = vld [vmem:[%s365] sm:$0xff]
        %368 = vst [vmem:[%s366] sm:$0xff] %v367
        %v369 = vld [vmem:[%s365 + $0x8] sm:$0xff]
        %370 = vst [vmem:[%s366 + $0x8] sm:$0xff] %v369
      $region263: #{tpu_custom_call.1} parent=257 // loop_footer
        %s364 = sadd.s32 1, %s360
      $region264: #{tpu_custom_call.1} parent=257 // loop_footer_branch
        %359 = sbr.rel target = $region260
      $region265: #{tpu_custom_call.1} parent=257 // loop_exit
        _
    $region258: #{tpu_custom_call.1} parent=242 // pred_fallthru
      _
    %p371 = pneg %p355
    // Predicated region
    $region266: #{tpu_custom_call.1} parent=242 // pred_check
      _
    $region267: #{tpu_custom_call.1} parent=242 // pred_check_branch
      %373 = sbr.rel (%p355) target = $region269
    $region268: #{tpu_custom_call.1} parent=242 // pred_region
      %s374 = sand.u32 16, 7
    $region269: #{tpu_custom_call.1} parent=242 // pred_fallthru
      _
  $region243: #{tpu_custom_call.1} parent=0 // pred_fallthru
    _
  // Predicated region
  $region244: #{tpu_custom_call.1} parent=0 // pred_check
    %p340 = pneg %p336
  $region245: #{tpu_custom_call.1} parent=0 // pred_check_branch
    %342 = sbr.rel (%p340) target = $region247
  $region246: #{tpu_custom_call.1} parent=0 // pred_region
    %s343 = sshllo.u32 0, 16
    loop: start=0, step=1, limit=1
    $region248: #{tpu_custom_call.1} parent=246 // loop_pre_header
      _
    $region249: #{tpu_custom_call.1} parent=246 // loop_header
      %s345 = sphi 0, %s349
      %p346 = scmp.ge.s32.totalorder %s345, 1
      %s350 = sphi %s332, %s332
      %s351 = sphi %s333, %s333
    $region250: #{tpu_custom_call.1} parent=246 // loop_header_branch
      %348 = sbr.rel (%p346) target = $region254
    $region251: #{tpu_custom_call.1} parent=246 // loop_body
      %v352 = vld [vmem:[%s350] sm:%s343]
      %353 = vst [vmem:[%s351] sm:%s343] %v352
    $region252: #{tpu_custom_call.1} parent=246 // loop_footer
      %s349 = sadd.s32 1, %s345
    $region253: #{tpu_custom_call.1} parent=246 // loop_footer_branch
      %344 = sbr.rel target = $region249
    $region254: #{tpu_custom_call.1} parent=246 // loop_exit
      _
  $region247: #{tpu_custom_call.1} parent=0 // pred_fallthru
    _
  // Predicated region
  $region270: #{tpu_custom_call.1} parent=0 // pred_check
    _
  $region271: #{tpu_custom_call.1} parent=0 // pred_check_branch
    %377 = sbr.rel (0) target = $region273
  $region272: #{tpu_custom_call.1} parent=0 // pred_region
    %378 = vsyncadd %s334, 256
  $region273: #{tpu_custom_call.1} parent=0 // pred_fallthru
    _
  %s379 = smul.u32 16, 1
  %s380 = sshll.u32 %s379, 4
  %381 = dma.done [#allocation2], %s380
  %s382 = sshll.u32 %s379, 4
  %383 = dma.done %s52, %s382
  %s384 = sshll.u32 %s379, 4
  %385 = dma.done %s99, %s384
  %s386 = sshll.u32 %s379, 4
  %387 = dma.done %s146, %s386
  %s388 = sshll.u32 %s379, 4
  %389 = dma.done %s193, %s388
  %s390 = sshll.u32 %s379, 4
  %391 = dma.done %s240, %s390
  %s392 = sshll.u32 %s379, 4
  %393 = dma.done %s287, %s392
  %s394 = sshll.u32 %s379, 4
  %395 = dma.done %s334, %s394
  %396 = vsyncmov [#allocation2]
  %s397 = vpop.sfrf %396
  %p398 = scmp.eq.s32.totalorder %s397, 0
  %p399 = pneg %p398
  %401 = shalt.err (%p399)
  %s402 = scalar_lea.sflag [#allocation2], 1
  %403 = vsyncmov %s402
  %s404 = vpop.sfrf %403
  %p405 = scmp.eq.s32.totalorder %s404, 0
  %p406 = pneg %p405
  %408 = shalt.err (%p406)
  %s409 = scalar_lea.sflag [#allocation2], 2
  %410 = vsyncmov %s409
  %s411 = vpop.sfrf %410
  %p412 = scmp.eq.s32.totalorder %s411, 0
  %p413 = pneg %p412
  %415 = shalt.err (%p413)
  %s416 = scalar_lea.sflag [#allocation2], 3
  %417 = vsyncmov %s416
  %s418 = vpop.sfrf %417
  %p419 = scmp.eq.s32.totalorder %s418, 0
  %p420 = pneg %p419
  %422 = shalt.err (%p420)
  %s423 = scalar_lea.sflag [#allocation2], 4
  %424 = vsyncmov %s423
  %s425 = vpop.sfrf %424
  %p426 = scmp.eq.s32.totalorder %s425, 0
  %p427 = pneg %p426
  %429 = shalt.err (%p427)
  %s430 = scalar_lea.sflag [#allocation2], 5
  %431 = vsyncmov %s430
  %s432 = vpop.sfrf %431
  %p433 = scmp.eq.s32.totalorder %s432, 0
  %p434 = pneg %p433
  %436 = shalt.err (%p434)
  %s437 = scalar_lea.sflag [#allocation2], 6
  %438 = vsyncmov %s437
  %s439 = vpop.sfrf %438
  %p440 = scmp.eq.s32.totalorder %s439, 0
  %p441 = pneg %p440
  %443 = shalt.err (%p441)
  %s444 = scalar_lea.sflag [#allocation2], 7
  %445 = vsyncmov %s444
  %s446 = vpop.sfrf %445
  %p447 = scmp.eq.s32.totalorder %s446, 0
  %p448 = pneg %p447
  %450 = shalt.err (%p448)

</llo_original>
